<compile_context>
chip_gen: v6e
topology: v6e:2x2x1
jax: 0.10.0
libtpu: 0.0.40
codegen_flags: <defaults>
</compile_context>

<pallas_src>
import jax
import jax.numpy as jnp
from jax.experimental import pallas as pl
from jax.experimental.pallas import tpu as pltpu

_LANES = 128
_CHUNK_ROWS = 64          # rows per inner chunk: 8 f32 vregs per input, mult of 32
_MAX_TILE_ROWS = 4096     # (4096,128) f32 = 2 MiB/input block; 8 MiB VMEM double-buffered


def _round_up(x: int, m: int) -> int:
    return ((x + m - 1) // m) * m


def _sublane(dtype) -> int:
    """Minimum sublane granularity for the dtype's packing."""
    return {4: 8, 2: 16, 1: 32}.get(jnp.dtype(dtype).itemsize, 8)


def _make_smape_kernel(rows: int, tile_rows: int, chunk_rows: int, n_blocks: int):
    n_chunks = tile_rows // chunk_rows
    n_groups = chunk_rows // 8           # (8,128) f32 vregs per chunk
    needs_mask = (rows % tile_rows) != 0
    last_valid_rows = rows - (n_blocks - 1) * tile_rows   # static

    def chunk_sum(yt_ref, yp_ref, c, valid_rows):
        # Row offset of this chunk inside the block (sublane-aligned).
        if isinstance(c, int):
            r0 = c * chunk_rows
        else:
            r0 = pl.multiple_of(c * chunk_rows, chunk_rows)
        yt = yt_ref[pl.ds(r0, chunk_rows), :].astype(jnp.float32)
        yp = yp_ref[pl.ds(r0, chunk_rows), :].astype(jnp.float32)

        num = jnp.abs(yp - yt)
        den = jnp.abs(yt) + jnp.abs(yp) + jnp.float32(1e-8)
        contrib = num / den            # exact; approx reciprocal breaks rtol=1e-5

        if valid_rows is not None:
            # Mask AFTER the divide so garbage read past the array end (NaN/Inf)
            # cannot propagate into the sum.
            row_ids = jax.lax.broadcasted_iota(jnp.int32, (chunk_rows, _LANES), 0)
            contrib = jnp.where(row_ids < (valid_rows - c * chunk_rows),
                                contrib, jnp.float32(0.0))

        # Fold (chunk_rows,128) -> (8,128): static tree of single-vreg adds
        # (pure VALU, no XLU cross-lane work, better summation accuracy).
        parts = [contrib[k * 8:(k + 1) * 8, :] for k in range(n_groups)]
        while len(parts) > 1:
            nxt = [parts[j] + parts[j + 1] for j in range(0, len(parts) - 1, 2)]
            if len(parts) % 2:
                nxt.append(parts[-1])
            parts = nxt
        return parts[0]

    def block_sum(yt_ref, yp_ref, valid_rows):
        if n_chunks == 1:
            return chunk_sum(yt_ref, yp_ref, 0, valid_rows)

        def body(c, acc):
            return acc + chunk_sum(yt_ref, yp_ref, c, valid_rows)

        return jax.lax.fori_loop(0, n_chunks, body,
                                 jnp.zeros((8, _LANES), jnp.float32), unroll=4)

    def kernel(yt_ref, yp_ref, out_ref):
        i = pl.program_id(0)

        @pl.when(i == 0)
        def _():
            out_ref[...] = jnp.zeros_like(out_ref)

        if not needs_mask:
            # Every block is exactly in-bounds: single unmasked fast path.
            out_ref[...] += block_sum(yt_ref, yp_ref, None)
        else:
            if n_blocks > 1:
                @pl.when(i < n_blocks - 1)
                def _():
                    # Interior blocks are provably fully in-bounds.
                    out_ref[...] += block_sum(yt_ref, yp_ref, None)

            @pl.when(i == n_blocks - 1)
            def _():
                out_ref[...] += block_sum(yt_ref, yp_ref, last_valid_rows)

    return kernel


def smape(y_true: jax.Array, y_pred: jax.Array) -> jax.Array:
    """100 * mean(|y_pred - y_true| / ((|y_true| + |y_pred| + 1e-8) / 2))."""
    assert y_true.shape == y_pred.shape, "y_true / y_pred shape mismatch"
    n_elems = y_true.size
    if n_elems == 0:
        return jnp.float32(0.0)

    # Keep native dtype: the kernel casts to f32 in VMEM (halves HBM traffic
    # for bf16/fp16 inputs vs. a wrapper-side cast).
    yt = jnp.ravel(y_true)
    yp = jnp.ravel(y_pred)

    rows = n_elems // _LANES
    rem = n_elems % _LANES
    eps = jnp.float32(1e-8)

    total = jnp.float32(0.0)

    if rem:
        # <128-element ragged lane tail: trivial jnp in the wrapper instead of
        # materializing a padded copy of the whole array in HBM.
        t = jax.lax.slice_in_dim(yt, rows * _LANES, n_elems).astype(jnp.float32)
        p = jax.lax.slice_in_dim(yp, rows * _LANES, n_elems).astype(jnp.float32)
        total = total + jnp.sum(jnp.abs(p - t) / (jnp.abs(t) + jnp.abs(p) + eps))

    if rows > 0:
        if rem:
            yt_main = jax.lax.slice_in_dim(yt, 0, rows * _LANES)
            yp_main = jax.lax.slice_in_dim(yp, 0, rows * _LANES)
        else:
            yt_main, yp_main = yt, yp
        yt2 = yt_main.reshape(rows, _LANES)
        yp2 = yp_main.reshape(rows, _LANES)

        sub = max(_sublane(yt2.dtype), _sublane(yp2.dtype))
        if rows >= _CHUNK_ROWS:
            tile_rows = min(_MAX_TILE_ROWS, _round_up(rows, _CHUNK_ROWS))
            chunk_rows = _CHUNK_ROWS
        else:
            tile_rows = _round_up(rows, sub)
            chunk_rows = tile_rows
        n_blocks = pl.cdiv(rows, tile_rows)

        bytes_accessed = rows * _LANES * (yt2.dtype.itemsize + yp2.dtype.itemsize) \
            + 8 * _LANES * 4
        cost = pl.CostEstimate(flops=7 * rows * _LANES, transcendentals=0,
                               bytes_accessed=bytes_accessed)

        partial = pl.pallas_call(
            _make_smape_kernel(rows, tile_rows, chunk_rows, n_blocks),
            out_shape=jax.ShapeDtypeStruct((8, _LANES), jnp.float32),
            grid_spec=pltpu.PrefetchScalarGridSpec(
                num_scalar_prefetch=0,
                grid=(n_blocks,),
                in_specs=[
                    pl.BlockSpec((tile_rows, _LANES), lambda i: (i, 0)),
                    pl.BlockSpec((tile_rows, _LANES), lambda i: (i, 0)),
                ],
                # Same output block for every grid step -> resident accumulator.
                out_specs=pl.BlockSpec((8, _LANES), lambda i: (0, 0)),
            ),
            compiler_params=pltpu.CompilerParams(
                dimension_semantics=("arbitrary",),
            ),
            cost_estimate=cost,
        )(yt2, yp2)

        total = total + jnp.sum(partial)   # single final cross-lane reduce

    # /2 folded into the scale: 100 * mean(n / (d/2)) == 200 * sum(n/d) / N
    return jnp.float32(200.0) * total / jnp.float32(n_elems)


def _smape_ref(y_true, y_pred):
    eps = 1e-08
    num = jnp.abs(y_pred - y_true)
    den = (jnp.abs(y_true) + jnp.abs(y_pred) + eps) / 2.0
    return 100.0 * jnp.mean(num / den)


if __name__ == "__main__":
    key = jax.random.PRNGKey(0)
    k1, k2 = jax.random.split(key)
    # Small NCHW-like shape consistent with a typical regression target tensor.
    shape = (2, 4, 16, 16)
    y_true = jax.random.normal(k1, shape, dtype=jnp.float32)
    y_pred = jax.random.normal(k2, shape, dtype=jnp.float32)

    out = smape(y_true, y_pred)
    jax.block_until_ready(out)

    ref = _smape_ref(y_true.astype(jnp.float32), y_pred.astype(jnp.float32))
    assert jnp.allclose(out, ref, rtol=1e-5, atol=1e-4), (out, ref)

    print("KERNEL_OK")
</pallas_src>

<mosaic_0001>
module attributes {stable_mosaic.version = 11 : i64} {
  func.func @kernel(%arg0: i32, %arg1: memref<16x128xf32, #tpu.memory_space<vmem>>, %arg2: memref<16x128xf32, #tpu.memory_space<vmem>>, %arg3: memref<8x128xf32, #tpu.memory_space<vmem>>) attributes {dimension_semantics = [#tpu.dimension_semantics<arbitrary>], iteration_bounds = array<i64: 1>, scalar_prefetch = 0 : i64, scratch_operands = 0 : i64, tpu.core_type = #tpu.core_type<tc>, window_params = [{transform_indices = @transform_0, window_bounds = array<i64: 16, 128>}, {transform_indices = @transform_1, window_bounds = array<i64: 16, 128>}, {pipeline_mode = #tpu.pipeline_mode<synchronous>, transform_indices = @transform_2, window_bounds = array<i64: 8, 128>}]} {
    %c0_i32 = arith.constant 0 : i32
    %0 = arith.cmpi eq, %arg0, %c0_i32 : i32
    %1 = arith.extui %0 : i1 to i32
    %c0_i32_0 = arith.constant 0 : i32
    %2 = arith.cmpi ne, %1, %c0_i32_0 : i32
    scf.if %2 {
      %cst_8 = arith.constant 0.000000e+00 : f32
      %19 = vector.broadcast %cst_8 : f32 to vector<8x128xf32>
      %c0_9 = arith.constant 0 : index
      %c0_10 = arith.constant 0 : index
      %20 = vector.load %arg3[%c0_9, %c0_10] : memref<8x128xf32, #tpu.memory_space<vmem>>, vector<8x128xf32>
      tpu.vector_store %arg3[%c0_9, %c0_10], %19 {strides = array<i32>} : memref<8x128xf32, #tpu.memory_space<vmem>>, vector<8x128xf32>,
    } else {
    }
    %c0 = arith.constant 0 : index
    %c0_1 = arith.constant 0 : index
    %3 = vector.load %arg3[%c0, %c0_1] : memref<8x128xf32, #tpu.memory_space<vmem>>, vector<8x128xf32>
    %c0_2 = arith.constant 0 : index
    %c0_3 = arith.constant 0 : index
    %4 = vector.load %arg1[%c0_2, %c0_3] : memref<16x128xf32, #tpu.memory_space<vmem>>, vector<16x128xf32>
    %c0_4 = arith.constant 0 : index
    %c0_5 = arith.constant 0 : index
    %5 = vector.load %arg2[%c0_4, %c0_5] : memref<16x128xf32, #tpu.memory_space<vmem>>, vector<16x128xf32>
    %6 = arith.subf %5, %4 : vector<16x128xf32>
    %7 = math.absf %6 : vector<16x128xf32>
    %8 = math.absf %4 : vector<16x128xf32>
    %9 = math.absf %5 : vector<16x128xf32>
    %10 = arith.addf %8, %9 : vector<16x128xf32>
    %cst = arith.constant 9.99999993E-9 : f32
    %11 = vector.broadcast %cst : f32 to vector<16x128xf32>
    %12 = arith.addf %10, %11 : vector<16x128xf32>
    %13 = arith.divf %7, %12 : vector<16x128xf32>
    %14 = vector.extract_strided_slice %13 {offsets = [0, 0], sizes = [8, 128], strides = [1, 1]} : vector<16x128xf32> to vector<8x128xf32>
    %15 = vector.extract_strided_slice %13 {offsets = [8, 0], sizes = [8, 128], strides = [1, 1]} : vector<16x128xf32> to vector<8x128xf32>
    %16 = arith.addf %14, %15 : vector<8x128xf32>
    %17 = arith.addf %3, %16 : vector<8x128xf32>
    %c0_6 = arith.constant 0 : index
    %c0_7 = arith.constant 0 : index
    %18 = vector.load %arg3[%c0_6, %c0_7] : memref<8x128xf32, #tpu.memory_space<vmem>>, vector<8x128xf32>
    tpu.vector_store %arg3[%c0_6, %c0_7], %17 {strides = array<i32>} : memref<8x128xf32, #tpu.memory_space<vmem>>, vector<8x128xf32>,
    return
  }
  func.func @transform_0(%arg0: i32) -> (i32, i32) {
    %c0_i32 = arith.constant 0 : i32
    %c0_i32_0 = arith.constant 0 : i32
    return %arg0, %c0_i32 : i32, i32
  }
  func.func @transform_1(%arg0: i32) -> (i32, i32) {
    %c0_i32 = arith.constant 0 : i32
    %c0_i32_0 = arith.constant 0 : i32
    return %arg0, %c0_i32 : i32, i32
  }
  func.func @transform_2(%arg0: i32) -> (i32, i32) {
    %c0_i32 = arith.constant 0 : i32
    %c0_i32_0 = arith.constant 0 : i32
    %c0_i32_1 = arith.constant 0 : i32
    return %c0_i32, %c0_i32_0 : i32, i32
  }
}

</mosaic_0001>

<llo_original>
// kernel: tpu_custom_call.1
$region0: #{tpu_custom_call.1}
  #allocation0 [shape = 'u32[]', space=smem, size = 0x4, offset = 0x4, fixed_abs, tag = 'smem constant byte address 0x4 - core index']
  #allocation1 [shape = 'u32[144,128]{1,0:T(1,128)}', space=vmem, size = 0x12000, scoped, tag = 'internal scratch']
  %s0 = inlined_call_operand.hbm [shape: f32[16,128], index: 0, kind: input, shape index: {}]
  %s1 = inlined_call_operand.hbm [shape: f32[16,128], index: 1, kind: input, shape index: {}]
  %s2 = inlined_call_operand.hbm [shape: f32[8,128], index: 2, kind: output, shape index: {}]
  %s3 = sld [smem:[#allocation0]]
  $region30: #{tpu_custom_call.1} parent=0
    _
  %s5 = ssub.s32 1, %s3
  %s6 = scalar_select 0, %s5, %s3
  $region1: #{tpu_custom_call.1} parent=0
    #allocation2 [shape = 'u8[8192]{0}', space=vmem, size = 0x2000, scoped, tag = 'input window, operand 0, single buffered']
    #allocation3 [shape = 's32[1]{0}', space=sflag, size = 0x4, scoped, tag = 'scoped memory for tpu_custom_call.1']
    #allocation4 [shape = 's32[1]{0}', space=sflag, size = 0x4, scoped, tag = 'scoped memory for tpu_custom_call.1']
    #allocation5 [shape = 'u8[8192]{0}', space=vmem, size = 0x2000, scoped, tag = 'input window, operand 1, single buffered']
    #allocation6 [shape = 's32[1]{0}', space=sflag, size = 0x4, scoped, tag = 'scoped memory for tpu_custom_call.1']
    #allocation7 [shape = 'u8[4096]{0}', space=vmem, size = 0x1000, scoped, tag = 'output window, operand 0, single buffered']
    %7 = vsyncpa [#allocation3], 0
    %8 = vsyncpa [#allocation6], 0
    %9 = vsyncpa [#allocation4], 0
    // Predicated region
    $region2: #{tpu_custom_call.1} parent=1 // pred_check
      _
    $region3: #{tpu_custom_call.1} parent=1 // pred_check_branch
      %11 = sbr.rel (0) target = $region5
    $region4: #{tpu_custom_call.1} parent=1 // pred_region
      %s13 = ssub.s32 256, 256
      %14 = vsyncadd [#allocation3], %s13
      %s15 = sshll.u32 [#allocation2], 4
      %s16 = int_to_ptr.vmem [resolvable:$true] %s15
      %21 = dma.hbm_to_vmem [thread:$0]  %s0, 256, %s16, [#allocation3], 128, 128, 8
    $region5: #{tpu_custom_call.1} parent=1 // pred_fallthru
      _
    // Predicated region
    $region6: #{tpu_custom_call.1} parent=1 // pred_check
      _
    $region7: #{tpu_custom_call.1} parent=1 // pred_check_branch
      %23 = sbr.rel (0) target = $region9
    $region8: #{tpu_custom_call.1} parent=1 // pred_region
      %s25 = ssub.s32 256, 256
      %26 = vsyncadd [#allocation6], %s25
      %s27 = sshll.u32 [#allocation5], 4
      %s28 = int_to_ptr.vmem [resolvable:$true] %s27
      %33 = dma.hbm_to_vmem [thread:$0]  %s1, 256, %s28, [#allocation6], 128, 128, 8
    $region9: #{tpu_custom_call.1} parent=1 // pred_fallthru
      _
    // Predicated region
    $region10: #{tpu_custom_call.1} parent=1 // pred_check
      _
    $region11: #{tpu_custom_call.1} parent=1 // pred_check_branch
      %35 = sbr.rel (0) target = $region13
    $region12: #{tpu_custom_call.1} parent=1 // pred_region
      %36 = dma.done [#allocation3], 256
    $region13: #{tpu_custom_call.1} parent=1 // pred_fallthru
      _
    // Predicated region
    $region14: #{tpu_custom_call.1} parent=1 // pred_check
      _
    $region15: #{tpu_custom_call.1} parent=1 // pred_check_branch
      %38 = sbr.rel (0) target = $region17
    $region16: #{tpu_custom_call.1} parent=1 // pred_region
      %39 = dma.done [#allocation6], 256
    $region17: #{tpu_custom_call.1} parent=1 // pred_fallthru
      _
    %p40 = scmp.eq.s32.totalorder 0, 0
    // Predicated region
    $region18: #{tpu_custom_call.1} parent=1 // pred_check
      %p41 = pneg %p40
    $region19: #{tpu_custom_call.1} parent=1 // pred_check_branch
      %43 = sbr.rel (%p41) target = $region21
    $region20: #{tpu_custom_call.1} parent=1 // pred_region
      %44 = vst [vmem:[#allocation7] sm:$0xff] 0.0
    $region21: #{tpu_custom_call.1} parent=1 // pred_fallthru
      _
    %v45 = vld [vmem:[#allocation7] sm:$0xff]
    %v46 = vld [vmem:[#allocation2] sm:$0xff]
    %v47 = vld [vmem:[#allocation2 + $0x8] sm:$0xff]
    %v48 = vld [vmem:[#allocation5] sm:$0xff]
    %v49 = vld [vmem:[#allocation5 + $0x8] sm:$0xff]
    %v50 = vsub.f32 %v48, %v46
    %v51 = vsub.f32 %v49, %v47
    %v52 = vand.u32 2147483647, %v50
    %v53 = vand.u32 2147483647, %v51
    %v54 = vand.u32 2147483647, %v46
    %v55 = vand.u32 2147483647, %v47
    %v56 = vand.u32 2147483647, %v48
    %v57 = vand.u32 2147483647, %v49
    %v58 = vadd.f32 %v54, %v56
    %v59 = vadd.f32 %v55, %v57
    %v60 = vadd.f32 %v58, 1e-08
    %v61 = vadd.f32 %v59, 1e-08
    %v62 = vrcp.pop %v60
    %v63 = vmul.f32 %v52, %v62
    %v64 = vrcp.pop %v61
    %v65 = vmul.f32 %v53, %v64
    %v66 = vadd.f32 %v63, %v65
    %v67 = vadd.f32 %v45, %v66
    %68 = vst [vmem:[#allocation7] sm:$0xff] %v67
    // Predicated region
    $region22: #{tpu_custom_call.1} parent=1 // pred_check
      _
    $region23: #{tpu_custom_call.1} parent=1 // pred_check_branch
      %70 = sbr.rel (0) target = $region25
    $region24: #{tpu_custom_call.1} parent=1 // pred_region
      %s72 = ssub.s32 128, 128
      %73 = vsyncadd [#allocation4], %s72
      %s75 = sshll.u32 [#allocation7], 4
      %s76 = int_to_ptr.vmem [resolvable:$true] %s75
      %78 = dma.vmem_to_hbm [thread:$0]  %s76, 128, %s2, [#allocation4]
    $region25: #{tpu_custom_call.1} parent=1 // pred_fallthru
      _
    // Predicated region
    $region26: #{tpu_custom_call.1} parent=1 // pred_check
      _
    $region27: #{tpu_custom_call.1} parent=1 // pred_check_branch
      %80 = sbr.rel (0) target = $region29
    $region28: #{tpu_custom_call.1} parent=1 // pred_region
      %81 = dma.done [#allocation4], 128
    $region29: #{tpu_custom_call.1} parent=1 // pred_fallthru
      _
    %82 = vsyncpa [#allocation3], 1
    %83 = vsyncpa [#allocation6], 1
    %84 = vsyncpa [#allocation4], 1

</llo_original>
